<compile_context>
chip_gen: v5e
topology: v5e:2x2
jax: 0.10.0
libtpu: 0.0.40
codegen_flags: <defaults>
</compile_context>

<pallas_src>
import jax
import jax.numpy as jnp
from jax.experimental import pallas as pl
from jax.experimental.pallas import tpu as pltpu

_LANE = 128
_NEG_BIG = -1e30   # finite "-inf": exp underflows to exactly 0 for padded lanes


def _round_up(n: int, m: int) -> int:
    return ((n + m - 1) // m) * m


# --------------------------------------------------------------------------- #
# Kernel
# --------------------------------------------------------------------------- #
def ffnn_kernel(x_ref, w1_ref, b1_ref, w2_ref, b2_ref, w3_ref, b3_ref, o_ref):
    # fc1 + ReLU.  x arrives f32; cast to bf16 here (in-kernel VPU cast is
    # hidden, no extra HBM pass) and accumulate in f32 on the MXU.
    x = x_ref[...].astype(jnp.bfloat16)
    h1 = jnp.dot(x, w1_ref[...], preferred_element_type=jnp.float32)
    h1 = jnp.maximum(h1 + b1_ref[...], 0.0)
    # dropout1: identity at inference time.

    # fc2 + ReLU (H2 zero-padded to 128 -> lane-dense h2; pad lanes are 0).
    h2 = jnp.dot(h1.astype(jnp.bfloat16), w2_ref[...],
                 preferred_element_type=jnp.float32)
    h2 = jnp.maximum(h2 + b2_ref[...], 0.0)
    # dropout2: identity at inference time.

    # fc3 (class dim padded to 128; padded bias entries are -1e30).
    logits = jnp.dot(h2.astype(jnp.bfloat16), w3_ref[...],
                     preferred_element_type=jnp.float32)
    logits = logits + b3_ref[...]

    # Numerically stable softmax over the (padded) class axis.  Padded lanes
    # contribute exp(-1e30 - m) == 0 to the denominator.  Exact divide so
    # every row sums to 1 to f32 precision (approx reciprocal was not tight
    # enough for strict normalization checks).
    m = jnp.max(logits, axis=-1, keepdims=True)
    e = jnp.exp(logits - m)
    denom = jnp.sum(e, axis=-1, keepdims=True)
    o_ref[...] = (e / denom).astype(o_ref.dtype)


# --------------------------------------------------------------------------- #
# One-time parameter preparation (hoisted out of the per-call path)
# --------------------------------------------------------------------------- #
def prepare_params(params):
    """Cast/pad weights once:
       * weights -> bf16 MXU operands,
       * H2 zero-padded to a multiple of 128 (exact: ReLU(0)=0, zero w3 rows),
       * class dim padded to a multiple of 128 with zero weight columns and a
         -1e30 bias so padded logits softmax to exactly 0.
    Weights are stored transposed vs PyTorch, i.e. (in_dim, out_dim)."""
    w1, b1 = params["w1"], params["b1"]
    w2, b2 = params["w2"], params["b2"]
    w3, b3 = params["w3"], params["b3"]
    D, H1 = w1.shape
    H2, C = w3.shape
    H2p = _round_up(H2, _LANE)
    Cp = _round_up(max(C, _LANE), _LANE)

    w1p = w1.astype(jnp.bfloat16)
    b1p = b1.reshape(1, H1).astype(jnp.float32)
    w2p = jnp.zeros((H1, H2p), jnp.bfloat16).at[:, :H2].set(w2.astype(jnp.bfloat16))
    b2p = jnp.zeros((1, H2p), jnp.float32).at[:, :H2].set(
        b2.reshape(1, H2).astype(jnp.float32))
    w3p = jnp.zeros((H2p, Cp), jnp.bfloat16).at[:H2, :C].set(w3.astype(jnp.bfloat16))
    b3p = jnp.full((1, Cp), _NEG_BIG, jnp.float32).at[:, :C].set(
        b3.reshape(1, C).astype(jnp.float32))

    return {"w1": w1p, "b1": b1p, "w2": w2p, "b2": b2p, "w3": w3p, "b3": b3p,
            "dims": (D, H1, H2p, Cp, C)}


# --------------------------------------------------------------------------- #
# Tiling heuristic
# --------------------------------------------------------------------------- #
def _choose_tiling(B, D, H1, H2p, Cp):
    # Rough per-row VMEM footprint: double-buffered f32 x tile + bf16 out tile
    # + f32/bf16 intermediates (h1, h2, logits, e).
    per_row = 2 * 4 * D + 2 * 2 * Cp + 6 * H1 + 6 * H2p + 8 * Cp
    cap = max(16, ((24 << 20) // per_row) // 16 * 16)   # keep well under VMEM

    if B <= 16:
        tb = 16                                   # one tiny step
    elif B <= 8192:
        tb = _round_up(pl.cdiv(B, 2), 16)         # two balanced steps (both v7x TCs)
    else:
        tb = 4096                                 # large tiles amortize step overhead
    tb = min(tb, cap)

    steps = pl.cdiv(B, tb)
    if steps > 1 and steps % 2:
        steps += 1                                # even step count -> balanced 2-TC split
    return tb, steps, per_row


# --------------------------------------------------------------------------- #
# Wrapper
# --------------------------------------------------------------------------- #
def intermediate_ffnn(x, prepared, *, tb=None, out_dtype=jnp.bfloat16, unpad=True):
    """x: (B, in_features) float32; prepared: output of prepare_params().

    Returns softmax probabilities (B, num_classes) in out_dtype (default bf16
    to halve HBM writeback; pass jnp.float32 for an exact-f32 result).  Set
    unpad=False to get the padded (Bp, 128k) block and skip the slice pass
    (padded lanes are exactly 0, padded rows are garbage-free but meaningless).
    """
    B, D = x.shape
    Dp, H1, H2p, Cp, C = prepared["dims"]
    assert D == Dp, "input feature dim does not match prepared params"

    if tb is None:
        tb, steps, _ = _choose_tiling(B, D, H1, H2p, Cp)
    else:
        tb = _round_up(tb, 16)
        steps = pl.cdiv(B, tb)
    Bp = tb * steps

    xp = x if Bp == B else jnp.pad(x, ((0, Bp - B), (0, 0)))  # padded rows independent

    w1, b1 = prepared["w1"], prepared["b1"]
    w2, b2 = prepared["w2"], prepared["b2"]
    w3, b3 = prepared["w3"], prepared["b3"]

    out_bytes = jnp.dtype(out_dtype).itemsize
    w_bytes = (w1.size + w2.size + w3.size) * 2 + (b1.size + b2.size + b3.size) * 4

    flops = 2 * Bp * (D * H1 + H1 * H2p + H2p * Cp)
    bytes_accessed = Bp * D * 4 + w_bytes + Bp * Cp * out_bytes
    cost = pl.CostEstimate(flops=flops,
                           transcendentals=Bp * Cp,
                           bytes_accessed=bytes_accessed)

    per_step_vmem = tb * (2 * 4 * D + 2 * out_bytes * Cp + 6 * H1 + 6 * H2p + 8 * Cp)
    vmem_limit = int(min(32 << 20, max(16 << 20, per_step_vmem + 2 * w_bytes + (2 << 20))))

    out = pl.pallas_call(
        ffnn_kernel,
        out_shape=jax.ShapeDtypeStruct((Bp, Cp), out_dtype),
        grid_spec=pltpu.PrefetchScalarGridSpec(
            num_scalar_prefetch=0,
            grid=(steps,),
            in_specs=[
                pl.BlockSpec((tb, D), lambda i: (i, 0)),     # x: tiled over batch
                pl.BlockSpec((D, H1), lambda i: (0, 0)),     # w1 (resident)
                pl.BlockSpec((1, H1), lambda i: (0, 0)),     # b1
                pl.BlockSpec((H1, H2p), lambda i: (0, 0)),   # w2 (H2-padded)
                pl.BlockSpec((1, H2p), lambda i: (0, 0)),    # b2
                pl.BlockSpec((H2p, Cp), lambda i: (0, 0)),   # w3 (class-padded)
                pl.BlockSpec((1, Cp), lambda i: (0, 0)),     # b3 (-1e30 padded)
            ],
            out_specs=pl.BlockSpec((tb, Cp), lambda i: (i, 0)),
        ),
        compiler_params=pltpu.CompilerParams(
            dimension_semantics=("parallel",),
            vmem_limit_bytes=vmem_limit),
        cost_estimate=cost,
    )(xp, w1, b1, w2, b2, w3, b3)

    if not unpad:
        return out
    # TODO(synk): fuse this slice into the consumer under one jit to avoid the
    # extra (bf16) HBM pass when the caller can take the padded block.
    return out[:B, :C]


# --------------------------------------------------------------------------- #
# Params / references / self-test
# --------------------------------------------------------------------------- #
def init_params(key, in_features, num_classes):
    """Deterministic synthetic init (PyTorch-Linear-like uniform fan-in scale).
    Weights stored transposed vs PyTorch, i.e. (in_dim, out_dim)."""
    def linear(k, fan_in, fan_out):
        kw, kb = jax.random.split(k)
        bound = 1.0 / jnp.sqrt(fan_in)
        w = jax.random.uniform(kw, (fan_in, fan_out), jnp.float32, -bound, bound)
        b = jax.random.uniform(kb, (1, fan_out), jnp.float32, -bound, bound)
        return w, b

    k1, k2, k3 = jax.random.split(key, 3)
    w1, b1 = linear(k1, in_features, 128)
    w2, b2 = linear(k2, 128, 64)
    w3, b3 = linear(k3, 64, num_classes)
    return {"w1": w1, "b1": b1, "w2": w2, "b2": b2, "w3": w3, "b3": b3}


def reference_forward_bf16(x, p):
    """Pure-JAX reference matching the kernel's precision choices
    (bf16 MXU operands, f32 accumulation, f32 bias/ReLU/softmax)."""
    h1 = jnp.maximum(jnp.dot(x.astype(jnp.bfloat16), p["w1"].astype(jnp.bfloat16),
                             preferred_element_type=jnp.float32) + p["b1"], 0.0)
    h2 = jnp.maximum(jnp.dot(h1.astype(jnp.bfloat16), p["w2"].astype(jnp.bfloat16),
                             preferred_element_type=jnp.float32) + p["b2"], 0.0)
    logits = jnp.dot(h2.astype(jnp.bfloat16), p["w3"].astype(jnp.bfloat16),
                     preferred_element_type=jnp.float32) + p["b3"]
    return jax.nn.softmax(logits, axis=1)


def reference_forward_f32(x, p):
    """Full-f32 reference matching the original PyTorch module's precision."""
    h1 = jnp.maximum(jnp.dot(x, p["w1"]) + p["b1"], 0.0)
    h2 = jnp.maximum(jnp.dot(h1, p["w2"]) + p["b2"], 0.0)
    logits = jnp.dot(h2, p["w3"]) + p["b3"]
    return jax.nn.softmax(logits, axis=1)


if __name__ == "__main__":
    key = jax.random.PRNGKey(0)
    kx, kp = jax.random.split(key)

    B, in_features, num_classes = 8, 32, 10
    x = jax.random.normal(kx, (B, in_features), jnp.float32)
    params = init_params(kp, in_features, num_classes)
    prepared = prepare_params(params)     # one-time prep, hoisted out of the call path

    out = intermediate_ffnn(x, prepared)  # bf16 probabilities by default
    out = jax.block_until_ready(out)
    assert out.shape == (B, num_classes)

    out_f32 = out.astype(jnp.float32)
    ref_bf16 = reference_forward_bf16(x, params)
    ref_f32 = reference_forward_f32(x, params)

    # Matches the same-precision reference closely (bf16 output rounding ~0.2%).
    assert jnp.allclose(out_f32, ref_bf16, atol=1e-2, rtol=1e-2)
    # Fidelity vs the true f32 model (looser: bf16 matmul operands).
    assert jnp.allclose(out_f32, ref_f32, atol=5e-2)
    # Exact divide in the kernel -> rows sum to 1 up to f32/bf16 rounding.
    assert jnp.allclose(jnp.sum(out_f32, axis=1), jnp.ones((B,)), atol=5e-3)

    print("KERNEL_OK")
</pallas_src>

<mosaic_0001>
module attributes {stable_mosaic.version = 11 : i64} {
  func.func @ffnn_kernel(%arg0: i32, %arg1: memref<16x32xf32, #tpu.memory_space<vmem>>, %arg2: memref<32x128xbf16, #tpu.memory_space<vmem>>, %arg3: memref<1x128xf32, #tpu.memory_space<vmem>>, %arg4: memref<128x128xbf16, #tpu.memory_space<vmem>>, %arg5: memref<1x128xf32, #tpu.memory_space<vmem>>, %arg6: memref<128x128xbf16, #tpu.memory_space<vmem>>, %arg7: memref<1x128xf32, #tpu.memory_space<vmem>>, %arg8: memref<16x128xbf16, #tpu.memory_space<vmem>>) attributes {dimension_semantics = [#tpu.dimension_semantics<parallel>], iteration_bounds = array<i64: 1>, scalar_prefetch = 0 : i64, scratch_operands = 0 : i64, tpu.core_type = #tpu.core_type<tc>, window_params = [{transform_indices = @transform_0, window_bounds = array<i64: 16, 32>}, {pipeline_mode = #tpu.pipeline_mode<synchronous>, transform_indices = @transform_1, window_bounds = array<i64: 32, 128>}, {pipeline_mode = #tpu.pipeline_mode<synchronous>, transform_indices = @transform_2, window_bounds = array<i64: 1, 128>}, {pipeline_mode = #tpu.pipeline_mode<synchronous>, transform_indices = @transform_3, window_bounds = array<i64: 128, 128>}, {pipeline_mode = #tpu.pipeline_mode<synchronous>, transform_indices = @transform_4, window_bounds = array<i64: 1, 128>}, {pipeline_mode = #tpu.pipeline_mode<synchronous>, transform_indices = @transform_5, window_bounds = array<i64: 128, 128>}, {pipeline_mode = #tpu.pipeline_mode<synchronous>, transform_indices = @transform_6, window_bounds = array<i64: 1, 128>}, {transform_indices = @transform_7, window_bounds = array<i64: 16, 128>}]} {
    %c0 = arith.constant 0 : index
    %c0_0 = arith.constant 0 : index
    %0 = vector.load %arg1[%c0, %c0_0] : memref<16x32xf32, #tpu.memory_space<vmem>>, vector<16x32xf32>
    %1 = arith.truncf %0 : vector<16x32xf32> to vector<16x32xbf16>
    %c0_1 = arith.constant 0 : index
    %c0_2 = arith.constant 0 : index
    %2 = vector.load %arg2[%c0_1, %c0_2] : memref<32x128xbf16, #tpu.memory_space<vmem>>, vector<32x128xbf16>
    %cst = arith.constant dense<0.000000e+00> : vector<16x128xf32>
    %3 = tpu.matmul %1, %2, %cst {dimension_numbers = #tpu.dot_dimension_numbers<[1], [0], [0], [1], [0, 0, 1, 1], [], []>} : vector<16x32xbf16>, vector<32x128xbf16>, vector<16x128xf32> -> vector<16x128xf32>
    %c0_3 = arith.constant 0 : index
    %c0_4 = arith.constant 0 : index
    %4 = vector.load %arg3[%c0_3, %c0_4] : memref<1x128xf32, #tpu.memory_space<vmem>>, vector<1x128xf32>
    %5 = vector.broadcast %4 : vector<1x128xf32> to vector<16x128xf32>
    %6 = arith.addf %3, %5 : vector<16x128xf32>
    %cst_5 = arith.constant 0.000000e+00 : f32
    %7 = vector.broadcast %cst_5 : f32 to vector<16x128xf32>
    %8 = arith.maximumf %6, %7 : vector<16x128xf32>
    %9 = arith.truncf %8 : vector<16x128xf32> to vector<16x128xbf16>
    %c0_6 = arith.constant 0 : index
    %c0_7 = arith.constant 0 : index
    %10 = vector.load %arg4[%c0_6, %c0_7] : memref<128x128xbf16, #tpu.memory_space<vmem>>, vector<128x128xbf16>
    %cst_8 = arith.constant dense<0.000000e+00> : vector<16x128xf32>
    %11 = tpu.matmul %9, %10, %cst_8 {dimension_numbers = #tpu.dot_dimension_numbers<[1], [0], [0], [1], [0, 0, 1, 1], [], []>} : vector<16x128xbf16>, vector<128x128xbf16>, vector<16x128xf32> -> vector<16x128xf32>
    %c0_9 = arith.constant 0 : index
    %c0_10 = arith.constant 0 : index
    %12 = vector.load %arg5[%c0_9, %c0_10] : memref<1x128xf32, #tpu.memory_space<vmem>>, vector<1x128xf32>
    %13 = vector.broadcast %12 : vector<1x128xf32> to vector<16x128xf32>
    %14 = arith.addf %11, %13 : vector<16x128xf32>
    %cst_11 = arith.constant 0.000000e+00 : f32
    %15 = vector.broadcast %cst_11 : f32 to vector<16x128xf32>
    %16 = arith.maximumf %14, %15 : vector<16x128xf32>
    %17 = arith.truncf %16 : vector<16x128xf32> to vector<16x128xbf16>
    %c0_12 = arith.constant 0 : index
    %c0_13 = arith.constant 0 : index
    %18 = vector.load %arg6[%c0_12, %c0_13] : memref<128x128xbf16, #tpu.memory_space<vmem>>, vector<128x128xbf16>
    %cst_14 = arith.constant dense<0.000000e+00> : vector<16x128xf32>
    %19 = tpu.matmul %17, %18, %cst_14 {dimension_numbers = #tpu.dot_dimension_numbers<[1], [0], [0], [1], [0, 0, 1, 1], [], []>} : vector<16x128xbf16>, vector<128x128xbf16>, vector<16x128xf32> -> vector<16x128xf32>
    %c0_15 = arith.constant 0 : index
    %c0_16 = arith.constant 0 : index
    %20 = vector.load %arg7[%c0_15, %c0_16] : memref<1x128xf32, #tpu.memory_space<vmem>>, vector<1x128xf32>
    %21 = vector.broadcast %20 : vector<1x128xf32> to vector<16x128xf32>
    %22 = arith.addf %19, %21 : vector<16x128xf32>
    %cst_17 = arith.constant dense<0xFF800000> : vector<16xf32>
    %23 = vector.multi_reduction <maximumf>, %22, %cst_17 [1] : vector<16x128xf32> to vector<16xf32>
    %24 = vector.shape_cast %23 : vector<16xf32> to vector<16x1xf32>
    %25 = vector.broadcast %24 : vector<16x1xf32> to vector<16x128xf32>
    %26 = arith.subf %22, %25 : vector<16x128xf32>
    %27 = math.exp %26 : vector<16x128xf32>
    %cst_18 = arith.constant dense<0.000000e+00> : vector<16xf32>
    %28 = vector.multi_reduction <add>, %27, %cst_18 [1] : vector<16x128xf32> to vector<16xf32>
    %29 = vector.shape_cast %28 : vector<16xf32> to vector<16x1xf32>
    %30 = vector.broadcast %29 : vector<16x1xf32> to vector<16x128xf32>
    %31 = arith.divf %27, %30 : vector<16x128xf32>
    %32 = arith.truncf %31 : vector<16x128xf32> to vector<16x128xbf16>
    %c0_19 = arith.constant 0 : index
    %c0_20 = arith.constant 0 : index
    %33 = vector.load %arg8[%c0_19, %c0_20] : memref<16x128xbf16, #tpu.memory_space<vmem>>, vector<16x128xbf16>
    tpu.vector_store %arg8[%c0_19, %c0_20], %32 {strides = array<i32>} : memref<16x128xbf16, #tpu.memory_space<vmem>>, vector<16x128xbf16>,
    return
  }
  func.func @transform_0(%arg0: i32) -> (i32, i32) {
    %c0_i32 = arith.constant 0 : i32
    %c0_i32_0 = arith.constant 0 : i32
    return %arg0, %c0_i32 : i32, i32
  }
  func.func @transform_1(%arg0: i32) -> (i32, i32) {
    %c0_i32 = arith.constant 0 : i32
    %c0_i32_0 = arith.constant 0 : i32
    %c0_i32_1 = arith.constant 0 : i32
    return %c0_i32, %c0_i32_0 : i32, i32
  }
  func.func @transform_2(%arg0: i32) -> (i32, i32) {
    %c0_i32 = arith.constant 0 : i32
    %c0_i32_0 = arith.constant 0 : i32
    %c0_i32_1 = arith.constant 0 : i32
    return %c0_i32, %c0_i32_0 : i32, i32
  }
  func.func @transform_3(%arg0: i32) -> (i32, i32) {
    %c0_i32 = arith.constant 0 : i32
    %c0_i32_0 = arith.constant 0 : i32
    %c0_i32_1 = arith.constant 0 : i32
    return %c0_i32, %c0_i32_0 : i32, i32
  }
  func.func @transform_4(%arg0: i32) -> (i32, i32) {
    %c0_i32 = arith.constant 0 : i32
    %c0_i32_0 = arith.constant 0 : i32
    %c0_i32_1 = arith.constant 0 : i32
    return %c0_i32, %c0_i32_0 : i32, i32
  }
  func.func @transform_5(%arg0: i32) -> (i32, i32) {
    %c0_i32 = arith.constant 0 : i32
    %c0_i32_0 = arith.constant 0 : i32
    %c0_i32_1 = arith.constant 0 : i32
    return %c0_i32, %c0_i32_0 : i32, i32
  }
  func.func @transform_6(%arg0: i32) -> (i32, i32) {
    %c0_i32 = arith.constant 0 : i32
    %c0_i32_0 = arith.constant 0 : i32
    %c0_i32_1 = arith.constant 0 : i32
    return %c0_i32, %c0_i32_0 : i32, i32
  }
  func.func @transform_7(%arg0: i32) -> (i32, i32) {
    %c0_i32 = arith.constant 0 : i32
    %c0_i32_0 = arith.constant 0 : i32
    return %arg0, %c0_i32 : i32, i32
  }
}

</mosaic_0001>

<llo_original>
// kernel: tpu_custom_call.1
$region0: #{tpu_custom_call.1}
  #allocation0 [shape = 'u32[]', space=smem, size = 0x4, offset = 0x4, fixed_abs, tag = 'smem constant byte address 0x4 - core index']
  #allocation1 [shape = 'u32[72,128]{1,0:T(1,128)}', space=vmem, size = 0x9000, scoped, tag = 'internal scratch']
  %s0 = inlined_call_operand.hbm [shape: f32[16,32], index: 0, kind: input, shape index: {}]
  %s1 = inlined_call_operand.hbm [shape: bf16[32,128], index: 1, kind: input, shape index: {}]
  %s2 = inlined_call_operand.vmem [shape: f32[1,128], index: 2, kind: input, shape index: {}]
  %s3 = inlined_call_operand.hbm [shape: bf16[128,128], index: 3, kind: input, shape index: {}]
  %s4 = inlined_call_operand.vmem [shape: f32[1,128], index: 4, kind: input, shape index: {}]
  %s5 = inlined_call_operand.hbm [shape: bf16[128,128], index: 5, kind: input, shape index: {}]
  %s6 = inlined_call_operand.vmem [shape: f32[1,128], index: 6, kind: input, shape index: {}]
  %s7 = inlined_call_operand.hbm [shape: bf16[16,128], index: 7, kind: output, shape index: {}]
  %s8 = sld [smem:[#allocation0]]
  $region54: #{tpu_custom_call.1} parent=0
    _
  %s10 = ssub.s32 1, %s8
  %s11 = scalar_select 0, %s10, %s8
  $region1: #{tpu_custom_call.1} parent=0
    #allocation2 [shape = 'u8[8192]{0}', space=vmem, size = 0x2000, scoped, tag = 'input window, operand 0, single buffered']
    #allocation3 [shape = 's32[1]{0}', space=sflag, size = 0x4, scoped, tag = 'scoped memory for tpu_custom_call.1']
    #allocation4 [shape = 's32[1]{0}', space=sflag, size = 0x4, scoped, tag = 'scoped memory for tpu_custom_call.1']
    #allocation5 [shape = 'u8[8192]{0}', space=vmem, size = 0x2000, scoped, tag = 'input window, operand 1, single buffered']
    #allocation6 [shape = 's32[1]{0}', space=sflag, size = 0x4, scoped, tag = 'scoped memory for tpu_custom_call.1']
    #allocation7 [shape = 'u8[32768]{0}', space=vmem, size = 0x8000, scoped, tag = 'input window, operand 3, single buffered']
    #allocation8 [shape = 'u8[32768]{0}', space=vmem, size = 0x8000, scoped, tag = 'input window, operand 5, single buffered']
    #allocation9 [shape = 's32[1]{0}', space=sflag, size = 0x4, scoped, tag = 'scoped memory for tpu_custom_call.1']
    #allocation10 [shape = 'u8[4096]{0}', space=vmem, size = 0x1000, scoped, tag = 'output window, operand 0, single buffered']
    %12 = vsyncpa [#allocation3], 0
    %13 = vsyncpa [#allocation6], 0
    %14 = vsyncpa [#allocation9], 0
    %15 = vsyncpa [#allocation4], 0
    // Predicated region
    $region2: #{tpu_custom_call.1} parent=1 // pred_check
      _
    $region3: #{tpu_custom_call.1} parent=1 // pred_check_branch
      %17 = sbr.rel (0) target = $region5
    $region4: #{tpu_custom_call.1} parent=1 // pred_region
      %19 = vsyncadd [#allocation3], 0
      %s20 = sshll.u32 %s0, 4
      %s21 = int_to_ptr.hbm [resolvable:$true] %s20
      %s22 = sshll.u32 [#allocation2], 4
      %s23 = int_to_ptr.vmem [resolvable:$true] %s22
      %28 = dma.hbm_to_vmem [thread:$0]  %s21, 256, %s23, [#allocation3], 128, 128, 8
    $region5: #{tpu_custom_call.1} parent=1 // pred_fallthru
      _
    // Predicated region
    $region6: #{tpu_custom_call.1} parent=1 // pred_check
      _
    $region7: #{tpu_custom_call.1} parent=1 // pred_check_branch
      %30 = sbr.rel (0) target = $region9
    $region8: #{tpu_custom_call.1} parent=1 // pred_region
      %32 = vsyncadd [#allocation6], 0
      %s33 = sshll.u32 %s1, 4
      %s34 = int_to_ptr.hbm [resolvable:$true] %s33
      %s35 = sshll.u32 [#allocation5], 4
      %s36 = int_to_ptr.vmem [resolvable:$true] %s35
      %41 = dma.hbm_to_vmem [thread:$0]  %s34, 256, %s36, [#allocation6], 64, 64, 4
    $region9: #{tpu_custom_call.1} parent=1 // pred_fallthru
      _
    // Predicated region
    $region10: #{tpu_custom_call.1} parent=1 // pred_check
      _
    $region11: #{tpu_custom_call.1} parent=1 // pred_check_branch
      %43 = sbr.rel (0) target = $region13
    $region12: #{tpu_custom_call.1} parent=1 // pred_region
      _
    $region13: #{tpu_custom_call.1} parent=1 // pred_fallthru
      _
    // Predicated region
    $region14: #{tpu_custom_call.1} parent=1 // pred_check
      _
    $region15: #{tpu_custom_call.1} parent=1 // pred_check_branch
      %45 = sbr.rel (0) target = $region17
    $region16: #{tpu_custom_call.1} parent=1 // pred_region
      %47 = vsyncadd [#allocation6], 0
      %s48 = sshll.u32 %s3, 4
      %s49 = int_to_ptr.hbm [resolvable:$true] %s48
      %s50 = sshll.u32 [#allocation7], 4
      %s51 = int_to_ptr.vmem [resolvable:$true] %s50
      %56 = dma.hbm_to_vmem [thread:$0]  %s49, 1024, %s51, [#allocation6], 64, 64, 4
    $region17: #{tpu_custom_call.1} parent=1 // pred_fallthru
      _
    // Predicated region
    $region18: #{tpu_custom_call.1} parent=1 // pred_check
      _
    $region19: #{tpu_custom_call.1} parent=1 // pred_check_branch
      %58 = sbr.rel (0) target = $region21
    $region20: #{tpu_custom_call.1} parent=1 // pred_region
      _
    $region21: #{tpu_custom_call.1} parent=1 // pred_fallthru
      _
    // Predicated region
    $region22: #{tpu_custom_call.1} parent=1 // pred_check
      _
    $region23: #{tpu_custom_call.1} parent=1 // pred_check_branch
      %60 = sbr.rel (0) target = $region25
    $region24: #{tpu_custom_call.1} parent=1 // pred_region
      %62 = vsyncadd [#allocation9], 0
      %s63 = sshll.u32 %s5, 4
      %s64 = int_to_ptr.hbm [resolvable:$true] %s63
      %s65 = sshll.u32 [#allocation8], 4
      %s66 = int_to_ptr.vmem [resolvable:$true] %s65
      %71 = dma.hbm_to_vmem [thread:$0]  %s64, 1024, %s66, [#allocation9], 64, 64, 4
    $region25: #{tpu_custom_call.1} parent=1 // pred_fallthru
      _
    // Predicated region
    $region26: #{tpu_custom_call.1} parent=1 // pred_check
      _
    $region27: #{tpu_custom_call.1} parent=1 // pred_check_branch
      %73 = sbr.rel (0) target = $region29
    $region28: #{tpu_custom_call.1} parent=1 // pred_region
      _
    $region29: #{tpu_custom_call.1} parent=1 // pred_fallthru
      _
    // Predicated region
    $region30: #{tpu_custom_call.1} parent=1 // pred_check
      _
    $region31: #{tpu_custom_call.1} parent=1 // pred_check_branch
      %75 = sbr.rel (0) target = $region33
    $region32: #{tpu_custom_call.1} parent=1 // pred_region
      %77 = dma.done [#allocation3], 256
    $region33: #{tpu_custom_call.1} parent=1 // pred_fallthru
      _
    // Predicated region
    $region34: #{tpu_custom_call.1} parent=1 // pred_check
      _
    $region35: #{tpu_custom_call.1} parent=1 // pred_check_branch
      %79 = sbr.rel (0) target = $region37
    $region36: #{tpu_custom_call.1} parent=1 // pred_region
      %81 = dma.done [#allocation6], 256
    $region37: #{tpu_custom_call.1} parent=1 // pred_fallthru
      _
    // Predicated region
    $region38: #{tpu_custom_call.1} parent=1 // pred_check
      _
    $region39: #{tpu_custom_call.1} parent=1 // pred_check_branch
      %83 = sbr.rel (0) target = $region41
    $region40: #{tpu_custom_call.1} parent=1 // pred_region
      %85 = dma.done [#allocation6], 1024
    $region41: #{tpu_custom_call.1} parent=1 // pred_fallthru
      _
    // Predicated region
    $region42: #{tpu_custom_call.1} parent=1 // pred_check
      _
    $region43: #{tpu_custom_call.1} parent=1 // pred_check_branch
      %87 = sbr.rel (0) target = $region45
    $region44: #{tpu_custom_call.1} parent=1 // pred_region
      %89 = dma.done [#allocation9], 1024
    $region45: #{tpu_custom_call.1} parent=1 // pred_fallthru
      _
    %v91 = vld [vmem:[#allocation2] sm:$0xff]
    %v92 = vld [vmem:[#allocation2 + $0x8] sm:$0xff]
    %v93 = vpack.c.bf16 %v92, %v91
    %v94 = vld [vmem:[#allocation5] sm:$0xf]
    %v95 = vld [vmem:[#allocation5 + $0x4] sm:$0xf]
    %v96 = vld [vmem:[#allocation5 + $0x8] sm:$0xf]
    %v97 = vld [vmem:[#allocation5 + $0xc] sm:$0xf]
    %v98 = vld [vmem:[%s2] sm:$0x1]
    %v100 = vperm.slane %v98, 0
    %v106 = vunpack.c.l.b16 %v94
    %v107 = vunpack.c.l.b16 %v95
    %v108 = vunpack.c.l.b16 %v96
    %v109 = vunpack.c.l.b16 %v97
    %v110 = vpack.c.b16 %v107, %v106
    %v111 = vpack.c.b16 %v109, %v108
    %vm114 = vcmask 261120
    %v116 = vsel %vm114, %v93, 0
    %118 = vmatpush.bf16.msra.mxu0 0
    %119 = vmatpush.bf16.msra.mxu0 0
    %120 = vmatpush.bf16.msra.mxu0 0
    %121 = vmatpush.bf16.msra.mxu0 0
    %122 = vmatpush.bf16.msra.mxu0 0
    %123 = vmatpush.bf16.msra.mxu0 0
    %124 = vmatpush.bf16.msra.mxu0 %v111
    %125 = vmatpush.bf16.msra.mxu0 %v110
    %126 = vmatmul.bf16.gmra.mxu0 %v116
    %v127 = vpop.f32.mrf.mxu0
    %v128 = vadd.f32 %v100, %v127
    %v129 = vpop.f32.mrf.mxu0
    %v130 = vadd.f32 %v100, %v129
    %131 = vdwg.mxu0
    %v132 = vmax.f32 %v128, 0.0
    %v133 = vmax.f32 %v130, 0.0
    %v134 = vpack.c.bf16 %v133, %v132
    %v135 = vld [vmem:[#allocation7] sm:$0xf]
    %v136 = vld [vmem:[#allocation7 + $0x4] sm:$0xf]
    %v137 = vld [vmem:[#allocation7 + $0x8] sm:$0xf]
    %v138 = vld [vmem:[#allocation7 + $0xc] sm:$0xf]
    %v139 = vld [vmem:[#allocation7 + $0x10] sm:$0xf]
    %v140 = vld [vmem:[#allocation7 + $0x14] sm:$0xf]
    %v141 = vld [vmem:[#allocation7 + $0x18] sm:$0xf]
    %v142 = vld [vmem:[#allocation7 + $0x1c] sm:$0xf]
    %v143 = vld [vmem:[#allocation7 + $0x20] sm:$0xf]
    %v144 = vld [vmem:[#allocation7 + $0x24] sm:$0xf]
    %v145 = vld [vmem:[#allocation7 + $0x28] sm:$0xf]
    %v146 = vld [vmem:[#allocation7 + $0x2c] sm:$0xf]
    %v147 = vld [vmem:[#allocation7 + $0x30] sm:$0xf]
    %v148 = vld [vmem:[#allocation7 + $0x34] sm:$0xf]
    %v149 = vld [vmem:[#allocation7 + $0x38] sm:$0xf]
    %v150 = vld [vmem:[#allocation7 + $0x3c] sm:$0xf]
    %v151 = vld [vmem:[%s4] sm:$0x1]
    %v153 = vperm.slane %v151, 0
    %v171 = vunpack.c.l.b16 %v135
    %v172 = vunpack.c.l.b16 %v136
    %v173 = vunpack.c.l.b16 %v137
    %v174 = vunpack.c.l.b16 %v138
    %v175 = vunpack.c.l.b16 %v139
    %v176 = vunpack.c.l.b16 %v140
    %v177 = vunpack.c.l.b16 %v141
    %v178 = vunpack.c.l.b16 %v142
    %v179 = vunpack.c.l.b16 %v143
    %v180 = vunpack.c.l.b16 %v144
    %v181 = vunpack.c.l.b16 %v145
    %v182 = vunpack.c.l.b16 %v146
    %v183 = vunpack.c.l.b16 %v147
    %v184 = vunpack.c.l.b16 %v148
    %v185 = vunpack.c.l.b16 %v149
    %v186 = vunpack.c.l.b16 %v150
    %v187 = vpack.c.b16 %v172, %v171
    %v188 = vpack.c.b16 %v174, %v173
    %v189 = vpack.c.b16 %v176, %v175
    %v190 = vpack.c.b16 %v178, %v177
    %v191 = vpack.c.b16 %v180, %v179
    %v192 = vpack.c.b16 %v182, %v181
    %v193 = vpack.c.b16 %v184, %v183
    %v194 = vpack.c.b16 %v186, %v185
    %203 = vmatpush.bf16.msra.mxu0 %v194
    %204 = vmatpush.bf16.msra.mxu0 %v193
    %205 = vmatpush.bf16.msra.mxu0 %v192
    %206 = vmatpush.bf16.msra.mxu0 %v191
    %207 = vmatpush.bf16.msra.mxu0 %v190
    %208 = vmatpush.bf16.msra.mxu0 %v189
    %209 = vmatpush.bf16.msra.mxu0 %v188
    %210 = vmatpush.bf16.msra.mxu0 %v187
    %211 = vmatmul.bf16.gmra.mxu0 %v134
    %v212 = vpop.f32.mrf.mxu0
    %v213 = vadd.f32 %v153, %v212
    %v214 = vpop.f32.mrf.mxu0
    %v215 = vadd.f32 %v153, %v214
    %216 = vdwg.mxu0
    %v217 = vmax.f32 %v213, 0.0
    %v218 = vmax.f32 %v215, 0.0
    %v219 = vpack.c.bf16 %v218, %v217
    %v220 = vld [vmem:[#allocation8] sm:$0xf]
    %v221 = vld [vmem:[#allocation8 + $0x4] sm:$0xf]
    %v222 = vld [vmem:[#allocation8 + $0x8] sm:$0xf]
    %v223 = vld [vmem:[#allocation8 + $0xc] sm:$0xf]
    %v224 = vld [vmem:[#allocation8 + $0x10] sm:$0xf]
    %v225 = vld [vmem:[#allocation8 + $0x14] sm:$0xf]
    %v226 = vld [vmem:[#allocation8 + $0x18] sm:$0xf]
    %v227 = vld [vmem:[#allocation8 + $0x1c] sm:$0xf]
    %v228 = vld [vmem:[#allocation8 + $0x20] sm:$0xf]
    %v229 = vld [vmem:[#allocation8 + $0x24] sm:$0xf]
    %v230 = vld [vmem:[#allocation8 + $0x28] sm:$0xf]
    %v231 = vld [vmem:[#allocation8 + $0x2c] sm:$0xf]
    %v232 = vld [vmem:[#allocation8 + $0x30] sm:$0xf]
    %v233 = vld [vmem:[#allocation8 + $0x34] sm:$0xf]
    %v234 = vld [vmem:[#allocation8 + $0x38] sm:$0xf]
    %v235 = vld [vmem:[#allocation8 + $0x3c] sm:$0xf]
    %v236 = vld [vmem:[%s6] sm:$0x1]
    %v238 = vperm.slane %v236, 0
    %v256 = vunpack.c.l.b16 %v220
    %v257 = vunpack.c.l.b16 %v221
    %v258 = vunpack.c.l.b16 %v222
    %v259 = vunpack.c.l.b16 %v223
    %v260 = vunpack.c.l.b16 %v224
    %v261 = vunpack.c.l.b16 %v225
    %v262 = vunpack.c.l.b16 %v226
    %v263 = vunpack.c.l.b16 %v227
    %v264 = vunpack.c.l.b16 %v228
    %v265 = vunpack.c.l.b16 %v229
    %v266 = vunpack.c.l.b16 %v230
    %v267 = vunpack.c.l.b16 %v231
    %v268 = vunpack.c.l.b16 %v232
    %v269 = vunpack.c.l.b16 %v233
    %v270 = vunpack.c.l.b16 %v234
    %v271 = vunpack.c.l.b16 %v235
    %v272 = vpack.c.b16 %v257, %v256
    %v273 = vpack.c.b16 %v259, %v258
    %v274 = vpack.c.b16 %v261, %v260
    %v275 = vpack.c.b16 %v263, %v262
    %v276 = vpack.c.b16 %v265, %v264
    %v277 = vpack.c.b16 %v267, %v266
    %v278 = vpack.c.b16 %v269, %v268
    %v279 = vpack.c.b16 %v271, %v270
    %288 = vmatpush.bf16.msra.mxu0 %v279
    %289 = vmatpush.bf16.msra.mxu0 %v278
    %290 = vmatpush.bf16.msra.mxu0 %v277
    %291 = vmatpush.bf16.msra.mxu0 %v276
    %292 = vmatpush.bf16.msra.mxu0 %v275
    %293 = vmatpush.bf16.msra.mxu0 %v274
    %294 = vmatpush.bf16.msra.mxu0 %v273
    %295 = vmatpush.bf16.msra.mxu0 %v272
    %296 = vmatmul.bf16.gmra.mxu0 %v219
    %v297 = vpop.f32.mrf.mxu0
    %v298 = vadd.f32 %v238, %v297
    %v299 = vpop.f32.mrf.mxu0
    %v300 = vadd.f32 %v238, %v299
    %301 = vdwg.mxu0
    %302 = vmax.xlane.f32.xlu0 %v298
    %v303 = vpop.xlane.xlu0 %302
    %304 = vmax.xlane.f32.xlu0 %v300
    %v305 = vpop.xlane.xlu0 %304
    %v306 = vsub.f32 %v298, %v303
    %v307 = vsub.f32 %v300, %v305
    %v308 = vmul.f32 %v306, 1.442695
    %v309 = vpow.pop %v308
    %v310 = vmul.f32 %v307, 1.442695
    %v311 = vpow.pop %v310
    %312 = vadd.xlane.f32.xlu0 %v309
    %v313 = vpop.xlane.xlu0 %312
    %314 = vadd.xlane.f32.xlu0 %v311
    %v315 = vpop.xlane.xlu0 %314
    %v316 = vrcp.pop %v313
    %v317 = vmul.f32 %v313, %v316
    %v318 = vsub.f32 1.0, %v317
    %v319 = vmul.f32 %v316, %v318
    %v320 = vadd.f32 %v316, %v319
    %vm321 = vweird.f32 %v313
    %vm322 = vweird.f32 %v316
    %vm323 = vmor %vm321, %vm322
    %v324 = vsel %vm323, %v316, %v320
    %v325 = vand.u32 2147483647, %v313
    %vm326 = vcmp.eq.f32.partialorder %v325, 8.507059e+37
    %v327 = vand.u32 %v313, 2147483648
    %v328 = vor.u32 1.1754944e-38, %v327
    %v329 = vsel %vm326, %v328, %v324
    %v330 = vmul.f32 %v309, %v329
    %v331 = vrcp.pop %v315
    %v332 = vmul.f32 %v315, %v331
    %v333 = vsub.f32 1.0, %v332
    %v334 = vmul.f32 %v331, %v333
    %v335 = vadd.f32 %v331, %v334
    %vm336 = vweird.f32 %v315
    %vm337 = vweird.f32 %v331
    %vm338 = vmor %vm336, %vm337
    %v339 = vsel %vm338, %v331, %v335
    %v340 = vand.u32 2147483647, %v315
    %vm341 = vcmp.eq.f32.partialorder %v340, 8.507059e+37
    %v342 = vand.u32 %v315, 2147483648
    %v343 = vor.u32 1.1754944e-38, %v342
    %v344 = vsel %vm341, %v343, %v339
    %v345 = vmul.f32 %v311, %v344
    %v346 = vpack.c.bf16 %v330, %v330
    %v347 = vpack.c.bf16 %v345, %v345
    %348 = vst [vmem:[#allocation10] sm:$0xf] %v346
    %349 = vst [vmem:[#allocation10 + $0x4] sm:$0xf] %v347
    // Predicated region
    $region46: #{tpu_custom_call.1} parent=1 // pred_check
      _
    $region47: #{tpu_custom_call.1} parent=1 // pred_check_branch
      %351 = sbr.rel (0) target = $region49
    $region48: #{tpu_custom_call.1} parent=1 // pred_region
      %353 = vsyncadd [#allocation4], 0
      %s354 = sshll.u32 [#allocation10], 4
      %s355 = int_to_ptr.vmem [resolvable:$true] %s354
      %s356 = sshll.u32 %s7, 4
      %s357 = int_to_ptr.hbm [resolvable:$true] %s356
      %362 = dma.vmem_to_hbm [thread:$0]  %s355, 128, %s357, [#allocation4], 64, 64, 4
    $region49: #{tpu_custom_call.1} parent=1 // pred_fallthru
      _
    // Predicated region
    $region50: #{tpu_custom_call.1} parent=1 // pred_check
      _
    $region51: #{tpu_custom_call.1} parent=1 // pred_check_branch
      %364 = sbr.rel (0) target = $region53
    $region52: #{tpu_custom_call.1} parent=1 // pred_region
      %366 = dma.done [#allocation4], 128
    $region53: #{tpu_custom_call.1} parent=1 // pred_fallthru
      _
    %367 = vsyncpa [#allocation3], 1
    %368 = vsyncpa [#allocation6], 1
    %369 = vsyncpa [#allocation9], 1
    %370 = vsyncpa [#allocation4], 1

</llo_original>
